<compile_context>
chip_gen: v6e
topology: v6e:2x2x1
jax: 0.10.0
libtpu: 0.0.40
codegen_flags: <defaults>
</compile_context>

<pallas_src>
import functools
import math

import jax
import jax.numpy as jnp
from jax.experimental import pallas as pl
from jax.experimental.pallas import tpu as pltpu


_MIB = 1024 * 1024


def _vmem_capacity_bytes():
    try:
        return int(pltpu.get_tpu_info().vmem_capacity_bytes)
    except Exception:
        return 64 * _MIB          # conservative fallback (v7x per-core VMEM)


def _vmem_budget_bytes():
    # Leave headroom for compiler-internal scratch / semaphores.
    return int(0.75 * _vmem_capacity_bytes())


# ---------------------------------------------------------------------------
# Scaled dot-product attention kernel
# ---------------------------------------------------------------------------
def _sdpa_kernel(q_ref, k_ref, v_ref, mask_ref, ctx_ref, attn_ref, *,
                 scale, dot_dtype):
    # q_ref: (HB, TQ, d_k), k_ref: (HB, S, d_k), v_ref: (HB, S, d_v)
    # mask_ref: (TQ, S) int8 (nonzero => masked), shared across the HB heads.
    # ctx_ref: (TQ, HB*d_v) lane-dense, attn_ref: (HB, TQ, S).
    HB, TQ, _ = q_ref.shape
    d_v = v_ref.shape[-1]

    # Fold 1/sqrt(d_k) into the small q tile (f32), then cast MXU operands.
    q = q_ref[...].astype(jnp.float32) * jnp.float32(scale)
    q = q.astype(dot_dtype)
    k = k_ref[...].astype(dot_dtype)

    # QK^T: contract the last dims directly (trans-B), f32 accumulation on MXU.
    scores = jnp.einsum("hqd,hkd->hqk", q, k,
                        preferred_element_type=jnp.float32)

    masked = mask_ref[...] != 0                  # (TQ, S) bool
    scores = jnp.where(masked[None, :, :], jnp.float32(-1.0e9), scores)

    # Numerically-stable softmax over the key axis (f32, VPU/EUP).
    m = jnp.max(scores, axis=-1, keepdims=True)
    e = jnp.exp(scores - m)
    denom = jnp.sum(e, axis=-1, keepdims=True)
    inv = pl.reciprocal(denom, approx=True)      # EUP vrcp (free slot)
    inv = inv * (2.0 - denom * inv)              # one Newton step -> ~f32 exact
    attn = e * inv

    # P @ V: MXU operands in dot_dtype, f32 accumulate.
    p = attn.astype(dot_dtype)
    v = v_ref[...].astype(dot_dtype)
    ctx = jnp.einsum("hqk,hkd->hqd", p, v, preferred_element_type=jnp.float32)

    attn_ref[...] = attn.astype(attn_ref.dtype)

    # Fill the lane-dense (TQ, HB*d_v) output block head-by-head (static
    # unroll, HB small).  The HBM writeback of the whole block is lane-dense;
    # the per-head stores only touch VMEM.
    for hh in range(HB):
        ctx_ref[:, hh * d_v:(hh + 1) * d_v] = ctx[hh].astype(ctx_ref.dtype)


def _sdpa_step_bytes(HB, TQ, S, d_k, d_v, in_bytes, attn_bytes):
    # Rough per-grid-step VMEM footprint (double-buffered I/O + f32 temps).
    kv = 2 * HB * S * (d_k + d_v) * in_bytes
    q = 2 * HB * TQ * d_k * in_bytes
    mask = 2 * TQ * S * 1
    ctx = 2 * TQ * HB * d_v * in_bytes
    attn = 2 * HB * TQ * S * attn_bytes
    work = 4 * HB * TQ * S * 4          # scores / exp / attn f32 intermediates
    return kv + q + mask + ctx + attn + work


def _pick_head_block(H, S, d_k, d_v, in_bytes, attn_bytes, budget):
    # Group heads per grid step: fewer grid steps, mask tile amortized over HB
    # heads, deeper batched MXU work.  Bigger cap on 128-MiB-VMEM parts.
    cap = _vmem_capacity_bytes()
    target = max(1, (256 if cap >= 96 * _MIB else 128) // max(d_k, 1))
    tq_probe = S if S <= 256 else 32
    best = 1
    for hb in range(1, H + 1):
        if H % hb:
            continue
        if hb > target:
            break
        if _sdpa_step_bytes(hb, tq_probe, S, d_k, d_v,
                            in_bytes, attn_bytes) <= budget:
            best = hb
    return best


def _pick_q_tile(S, HB, d_k, d_v, in_bytes, attn_bytes, budget):
    # Query tiling bounds per-step VMEM to O(TQ*S).  TQ >= 32 keeps the int8
    # mask tile above its (32, 128) minimum tile when TQ < S.
    if S <= 256:
        return S
    cands = [tq for tq in (512, 256, 128, 64, 32) if S % tq == 0]
    if not cands:
        # TODO(synk): pad S to a multiple of 128 for awkward sequence lengths.
        return S
    for tq in cands:
        if _sdpa_step_bytes(HB, tq, S, d_k, d_v,
                            in_bytes, attn_bytes) <= budget:
            return tq
    return cands[-1]


def scaled_dot_product_attention(Q, K, V, attn_mask, *,
                                 attn_dtype=jnp.bfloat16,
                                 allow_bf16_matmul=True):
    """Pallas TPU ScaledDotProductAttention.

    Q, K: [B, H, S, d_k]; V: [B, H, S, d_v]
    attn_mask: [B, S, S], True/nonzero => masked.  The head broadcast
      (attn_mask.unsqueeze(1).repeat(1, H, 1, 1) in PyTorch) is done via the
      BlockSpec index_map, so the mask is never replicated in HBM.
    Returns (context [B, S, H*d_v], attn [B, H, S, S] in attn_dtype).
    """
    B, H, S, d_k = Q.shape
    d_v = V.shape[-1]
    assert K.shape == (B, H, S, d_k) and V.shape == (B, H, S, d_v)
    assert attn_mask.shape == (B, S, S)

    mask = attn_mask.astype(jnp.int8)            # 4x less HBM traffic vs int32

    in_bytes = jnp.dtype(Q.dtype).itemsize
    attn_bytes = jnp.dtype(attn_dtype).itemsize
    budget = _vmem_budget_bytes()

    HB = _pick_head_block(H, S, d_k, d_v, in_bytes, attn_bytes, budget)
    TQ = _pick_q_tile(S, HB, d_k, d_v, in_bytes, attn_bytes, budget)
    n_hb = H // HB
    n_q = S // TQ

    dot_dtype = (jnp.bfloat16
                 if (allow_bf16_matmul or Q.dtype == jnp.bfloat16)
                 else Q.dtype)

    kernel = functools.partial(_sdpa_kernel, scale=1.0 / math.sqrt(d_k),
                               dot_dtype=dot_dtype)

    # q-tile axis innermost so the (HB, S, d_k/d_v) K/V blocks stay resident
    # across query tiles (their block index does not change along that axis).
    grid = (B, n_hb, n_q)

    q_spec = pl.BlockSpec((None, HB, TQ, d_k), lambda b, h, i: (b, h, i, 0))
    k_spec = pl.BlockSpec((None, HB, S, d_k), lambda b, h, i: (b, h, 0, 0))
    v_spec = pl.BlockSpec((None, HB, S, d_v), lambda b, h, i: (b, h, 0, 0))
    m_spec = pl.BlockSpec((None, TQ, S), lambda b, h, i: (b, i, 0))
    # ctx written directly in [B, S, H*d_v]: lane-dense store, no XLA transpose.
    ctx_spec = pl.BlockSpec((None, TQ, HB * d_v), lambda b, h, i: (b, i, h))
    attn_spec = pl.BlockSpec((None, HB, TQ, S), lambda b, h, i: (b, h, i, 0))

    ctx, attn = pl.pallas_call(
        kernel,
        out_shape=(
            jax.ShapeDtypeStruct((B, S, H * d_v), Q.dtype),
            jax.ShapeDtypeStruct((B, H, S, S), attn_dtype),
        ),
        grid_spec=pltpu.PrefetchScalarGridSpec(
            num_scalar_prefetch=0,
            grid=grid,
            in_specs=[q_spec, k_spec, v_spec, m_spec],
            out_specs=[ctx_spec, attn_spec],
        ),
        compiler_params=pltpu.CompilerParams(
            # q axis "arbitrary": keep megacore sharding on B/H so both v7x
            # cores don't each re-DMA the resident K/V blocks and mask.
            dimension_semantics=("parallel", "parallel", "arbitrary"),
            vmem_limit_bytes=budget,
        ),
    )(Q, K, V, mask)
    # TODO(synk): add a ctx-only flash path (no attn writeback) for callers
    # that ignore attn; that removes the dominant S^2 DMA entirely.
    return ctx, attn


# ---------------------------------------------------------------------------
# Fused output projection + residual + LayerNorm kernel
# ---------------------------------------------------------------------------
def _out_proj_ln_kernel(x_ref, w_ref, b_ref, res_ref, g_ref, beta_ref, out_ref,
                        *, eps, dot_dtype):
    # x_ref: (TM, H*d_v), w_ref: (H*d_v, d_model), b/g/beta: (1, d_model)
    # res_ref: (TM, d_model)
    x = x_ref[...].astype(dot_dtype)
    w = w_ref[...].astype(dot_dtype)
    y = jnp.dot(x, w, preferred_element_type=jnp.float32)
    y = y + b_ref[...].astype(jnp.float32) + res_ref[...].astype(jnp.float32)
    mu = jnp.mean(y, axis=-1, keepdims=True)
    yc = y - mu
    var = jnp.mean(yc * yc, axis=-1, keepdims=True)
    yn = yc * jax.lax.rsqrt(var + eps)
    out_ref[...] = (yn * g_ref[...].astype(jnp.float32)
                    + beta_ref[...].astype(jnp.float32)).astype(out_ref.dtype)


def _pick_row_tile(n_rows):
    for tm in (512, 256, 128, 64, 32, 16, 8):
        if n_rows % tm == 0:
            return tm
    return n_rows


def output_proj_layernorm(context, w1, b1, residual, gamma, beta, *, eps=1e-5,
                          allow_bf16_matmul=True):
    """LayerNorm(context @ w1 + b1 + residual) with affine gamma/beta."""
    N, F = context.shape
    d_model = w1.shape[1]
    TM = _pick_row_tile(N)
    budget = _vmem_budget_bytes()

    # Guard the resident (F, d_model) weight: a large f32 weight alone can
    # blow v7x's 64 MiB VMEM, so down-cast when allowed or when it is big.
    w_is_big = F * d_model * jnp.dtype(w1.dtype).itemsize > 16 * _MIB
    use_bf16 = (allow_bf16_matmul or w_is_big
                or context.dtype == jnp.bfloat16)
    # TODO(synk): for an exact f32 path at very large d_model, add a K-tiled
    # grid axis with an f32 VMEM accumulator instead of down-casting w1.
    w_kernel = w1.astype(jnp.bfloat16) if use_bf16 else w1
    dot_dtype = jnp.bfloat16 if use_bf16 else context.dtype

    kernel = functools.partial(_out_proj_ln_kernel, eps=float(eps),
                               dot_dtype=dot_dtype)
    return pl.pallas_call(
        kernel,
        out_shape=jax.ShapeDtypeStruct((N, d_model), residual.dtype),
        grid_spec=pltpu.PrefetchScalarGridSpec(
            num_scalar_prefetch=0,
            grid=(N // TM,),
            in_specs=[
                pl.BlockSpec((TM, F), lambda i: (i, 0)),
                pl.BlockSpec((F, d_model), lambda i: (0, 0)),  # weight resident
                pl.BlockSpec((1, d_model), lambda i: (0, 0)),
                pl.BlockSpec((TM, d_model), lambda i: (i, 0)),
                pl.BlockSpec((1, d_model), lambda i: (0, 0)),
                pl.BlockSpec((1, d_model), lambda i: (0, 0)),
            ],
            out_specs=pl.BlockSpec((TM, d_model), lambda i: (i, 0)),
        ),
        compiler_params=pltpu.CompilerParams(
            dimension_semantics=("parallel",),
            vmem_limit_bytes=budget,
        ),
    )(context, w_kernel, b1.reshape(1, d_model), residual,
      gamma.reshape(1, d_model), beta.reshape(1, d_model))


# ---------------------------------------------------------------------------
# Full MultiHeadAttention forward (matches the PyTorch module semantics)
# ---------------------------------------------------------------------------
def multi_head_attention_forward(params, Q, K, V, attn_mask, *, n_heads, d_k,
                                 d_v, eps=1e-5, attn_dtype=jnp.bfloat16,
                                 allow_bf16_matmul=True):
    """Q, K, V: [B, S, d_model]; attn_mask: [B, S, S] bool (True => masked).

    Returns (LayerNorm(lin1(context) + Q), attn) like the PyTorch module.
    Weights are stored as [in, out] (i.e. already transposed vs nn.Linear).
    """
    B, S, d_model = Q.shape
    # Input projections: plain dense GEMMs, left to XLA (the Pallas work is
    # concentrated in the attention + fused output/LN kernels).
    q_s = (Q @ params["wq"] + params["bq"]).reshape(B, S, n_heads, d_k)
    k_s = (K @ params["wk"] + params["bk"]).reshape(B, S, n_heads, d_k)
    v_s = (V @ params["wv"] + params["bv"]).reshape(B, S, n_heads, d_v)
    # TODO(synk): fold these head-major relayouts into the SDPA BlockSpecs to
    # save one HBM round-trip per projection (secondary to the S^2 traffic).
    q_s = jnp.transpose(q_s, (0, 2, 1, 3))
    k_s = jnp.transpose(k_s, (0, 2, 1, 3))
    v_s = jnp.transpose(v_s, (0, 2, 1, 3))

    ctx, attn = scaled_dot_product_attention(
        q_s, k_s, v_s, attn_mask, attn_dtype=attn_dtype,
        allow_bf16_matmul=allow_bf16_matmul)

    # ctx already comes back lane-dense as [B, S, H*d_v]: this reshape is free.
    context = ctx.reshape(B * S, n_heads * d_v)
    out = output_proj_layernorm(context, params["w1"], params["b1"],
                                Q.reshape(B * S, d_model),
                                params["gamma"], params["beta"], eps=eps,
                                allow_bf16_matmul=allow_bf16_matmul)
    return out.reshape(B, S, d_model), attn


# ---------------------------------------------------------------------------
# Pure-JAX reference
# ---------------------------------------------------------------------------
def _mha_reference(params, Q, K, V, attn_mask, *, n_heads, d_k, d_v, eps=1e-5):
    B, S, d_model = Q.shape
    q_s = (Q @ params["wq"] + params["bq"]).reshape(B, S, n_heads, d_k)
    k_s = (K @ params["wk"] + params["bk"]).reshape(B, S, n_heads, d_k)
    v_s = (V @ params["wv"] + params["bv"]).reshape(B, S, n_heads, d_v)
    q_s = jnp.transpose(q_s, (0, 2, 1, 3))
    k_s = jnp.transpose(k_s, (0, 2, 1, 3))
    v_s = jnp.transpose(v_s, (0, 2, 1, 3))
    scores = jnp.einsum("bhqd,bhkd->bhqk", q_s, k_s) / jnp.sqrt(jnp.float32(d_k))
    scores = jnp.where(attn_mask[:, None, :, :], jnp.float32(-1.0e9), scores)
    attn = jax.nn.softmax(scores, axis=-1)
    ctx = jnp.einsum("bhqk,bhkd->bhqd", attn, v_s)
    ctx = jnp.transpose(ctx, (0, 2, 1, 3)).reshape(B, S, n_heads * d_v)
    y = ctx @ params["w1"] + params["b1"] + Q
    mu = y.mean(-1, keepdims=True)
    var = jnp.mean((y - mu) ** 2, axis=-1, keepdims=True)
    y = (y - mu) / jnp.sqrt(var + eps) * params["gamma"] + params["beta"]
    return y, attn


if __name__ == "__main__":
    B, S, d_model, n_heads, d_k, d_v = 2, 8, 32, 2, 16, 16

    key = jax.random.PRNGKey(0)
    ks = jax.random.split(key, 11)

    def init(k, shape, scale=0.1):
        return scale * jax.random.normal(k, shape, dtype=jnp.float32)

    params = {
        "wq": init(ks[0], (d_model, n_heads * d_k)),
        "bq": init(ks[1], (n_heads * d_k,)),
        "wk": init(ks[2], (d_model, n_heads * d_k)),
        "bk": init(ks[3], (n_heads * d_k,)),
        "wv": init(ks[4], (d_model, n_heads * d_v)),
        "bv": init(ks[5], (n_heads * d_v,)),
        "w1": init(ks[6], (n_heads * d_v, d_model)),
        "b1": init(ks[7], (d_model,)),
        "gamma": 1.0 + init(ks[8], (d_model,)),
        "beta": init(ks[9], (d_model,)),
    }
    x = jax.random.normal(ks[10], (B, S, d_model), dtype=jnp.float32)

    # Padding-style mask: mask out the last 3 key positions for every query.
    pad = jnp.arange(S) >= (S - 3)
    attn_mask = jnp.broadcast_to(pad[None, None, :], (B, S, S))

    out_ref, attn_ref = _mha_reference(
        params, x, x, x, attn_mask, n_heads=n_heads, d_k=d_k, d_v=d_v)

    # 1) Exact path (f32 attn, f32 MXU operands): bit-level close to reference.
    out_exact, attn_exact = multi_head_attention_forward(
        params, x, x, x, attn_mask, n_heads=n_heads, d_k=d_k, d_v=d_v,
        attn_dtype=jnp.float32, allow_bf16_matmul=False)
    jax.block_until_ready((out_exact, attn_exact))
    assert jnp.allclose(attn_exact, attn_ref, atol=1e-4, rtol=1e-4), float(
        jnp.max(jnp.abs(attn_exact - attn_ref)))
    assert jnp.allclose(out_exact, out_ref, atol=1e-4, rtol=1e-4), float(
        jnp.max(jnp.abs(out_exact - out_ref)))

    # 2) Fast path (defaults: bf16 attn writeback + bf16 MXU operands).
    out_fast, attn_fast = multi_head_attention_forward(
        params, x, x, x, attn_mask, n_heads=n_heads, d_k=d_k, d_v=d_v)
    jax.block_until_ready((out_fast, attn_fast))
    attn_fast32 = attn_fast.astype(jnp.float32)
    assert jnp.allclose(attn_fast32, attn_ref, atol=1e-2, rtol=0), float(
        jnp.max(jnp.abs(attn_fast32 - attn_ref)))
    assert jnp.allclose(out_fast, out_ref, atol=3e-2, rtol=3e-2), float(
        jnp.max(jnp.abs(out_fast - out_ref)))

    print("KERNEL_OK")
</pallas_src>

<mosaic_0001>
module attributes {stable_mosaic.version = 11 : i64} {
  func.func @_sdpa_kernel(%arg0: i32, %arg1: i32, %arg2: i32, %arg3: memref<1x2x8x16xf32, #tpu.memory_space<vmem>>, %arg4: memref<1x2x8x16xf32, #tpu.memory_space<vmem>>, %arg5: memref<1x2x8x16xf32, #tpu.memory_space<vmem>>, %arg6: memref<1x8x8xi8, #tpu.memory_space<vmem>>, %arg7: memref<1x8x32xf32, #tpu.memory_space<vmem>>, %arg8: memref<1x2x8x8xf32, #tpu.memory_space<vmem>>) attributes {dimension_semantics = [#tpu.dimension_semantics<parallel>, #tpu.dimension_semantics<parallel>, #tpu.dimension_semantics<arbitrary>], iteration_bounds = array<i64: 2, 1, 1>, scalar_prefetch = 0 : i64, scratch_operands = 0 : i64, tpu.core_type = #tpu.core_type<tc>, window_params = [{transform_indices = @transform_0, window_bounds = array<i64: 1, 2, 8, 16>}, {transform_indices = @transform_1, window_bounds = array<i64: 1, 2, 8, 16>}, {transform_indices = @transform_2, window_bounds = array<i64: 1, 2, 8, 16>}, {transform_indices = @transform_3, window_bounds = array<i64: 1, 8, 8>}, {transform_indices = @transform_4, window_bounds = array<i64: 1, 8, 32>}, {transform_indices = @transform_5, window_bounds = array<i64: 1, 2, 8, 8>}]} {
    %c0 = arith.constant 0 : index
    %c0_0 = arith.constant 0 : index
    %c0_1 = arith.constant 0 : index
    %c0_2 = arith.constant 0 : index
    %0 = vector.load %arg3[%c0, %c0_0, %c0_1, %c0_2] : memref<1x2x8x16xf32, #tpu.memory_space<vmem>>, vector<1x2x8x16xf32>
    %1 = vector.shape_cast %0 : vector<1x2x8x16xf32> to vector<2x8x16xf32>
    %cst = arith.constant 2.500000e-01 : f32
    %2 = vector.broadcast %cst : f32 to vector<2x8x16xf32>
    %3 = arith.mulf %1, %2 : vector<2x8x16xf32>
    %c0_3 = arith.constant 0 : index
    %c0_4 = arith.constant 0 : index
    %c0_5 = arith.constant 0 : index
    %c0_6 = arith.constant 0 : index
    %4 = vector.load %arg4[%c0_3, %c0_4, %c0_5, %c0_6] : memref<1x2x8x16xf32, #tpu.memory_space<vmem>>, vector<1x2x8x16xf32>
    %5 = vector.shape_cast %4 : vector<1x2x8x16xf32> to vector<2x8x16xf32>
    "tpu.trace_start"() <{level = 10 : i32, message = "hqd,hkd->hqk"}> : () -> ()
    %cst_7 = arith.constant dense<0.000000e+00> : vector<2x8x8xf32>
    %6 = tpu.matmul %3, %5, %cst_7 {dimension_numbers = #tpu.dot_dimension_numbers<[2], [2], [1], [1], [0, 0, 0, 1, 1, 1], [0], [0]>} : vector<2x8x16xf32>, vector<2x8x16xf32>, vector<2x8x8xf32> -> vector<2x8x8xf32>
    "tpu.trace_stop"() : () -> ()
    %c0_8 = arith.constant 0 : index
    %c0_9 = arith.constant 0 : index
    %c0_10 = arith.constant 0 : index
    %7 = vector.load %arg6[%c0_8, %c0_9, %c0_10] : memref<1x8x8xi8, #tpu.memory_space<vmem>>, vector<1x8x8xi8>
    %8 = vector.shape_cast %7 : vector<1x8x8xi8> to vector<8x8xi8>
    %c0_i8 = arith.constant 0 : i8
    %9 = vector.broadcast %c0_i8 : i8 to vector<8x8xi8>
    %10 = arith.cmpi ne, %8, %9 : vector<8x8xi8>
    %11 = vector.shape_cast %10 : vector<8x8xi1> to vector<1x8x8xi1>
    %cst_11 = arith.constant -1.000000e+09 : f32
    %12 = vector.shape_cast %11 : vector<1x8x8xi1> to vector<1x8x8xi1>
    %13 = vector.broadcast %12 : vector<1x8x8xi1> to vector<2x8x8xi1>
    %14 = vector.broadcast %cst_11 : f32 to vector<2x8x8xf32>
    %15 = arith.select %13, %14, %6 : vector<2x8x8xi1>, vector<2x8x8xf32>
    %cst_12 = arith.constant dense<0xFF800000> : vector<2x8xf32>
    %16 = vector.multi_reduction <maximumf>, %15, %cst_12 [2] : vector<2x8x8xf32> to vector<2x8xf32>
    %17 = vector.shape_cast %16 : vector<2x8xf32> to vector<2x8x1xf32>
    %18 = vector.broadcast %17 : vector<2x8x1xf32> to vector<2x8x8xf32>
    %19 = arith.subf %15, %18 : vector<2x8x8xf32>
    %20 = math.exp %19 : vector<2x8x8xf32>
    %cst_13 = arith.constant dense<0.000000e+00> : vector<2x8xf32>
    %21 = vector.multi_reduction <add>, %20, %cst_13 [2] : vector<2x8x8xf32> to vector<2x8xf32>
    %22 = vector.shape_cast %21 : vector<2x8xf32> to vector<2x8x1xf32>
    %23 = tpu.reciprocal %22 {approx = true} : vector<2x8x1xf32> -> vector<2x8x1xf32>
    %24 = arith.mulf %22, %23 : vector<2x8x1xf32>
    %cst_14 = arith.constant 2.000000e+00 : f32
    %25 = vector.broadcast %cst_14 : f32 to vector<2x8x1xf32>
    %26 = arith.subf %25, %24 : vector<2x8x1xf32>
    %27 = arith.mulf %23, %26 : vector<2x8x1xf32>
    %28 = vector.broadcast %27 : vector<2x8x1xf32> to vector<2x8x8xf32>
    %29 = arith.mulf %20, %28 : vector<2x8x8xf32>
    %c0_15 = arith.constant 0 : index
    %c0_16 = arith.constant 0 : index
    %c0_17 = arith.constant 0 : index
    %c0_18 = arith.constant 0 : index
    %30 = vector.load %arg5[%c0_15, %c0_16, %c0_17, %c0_18] : memref<1x2x8x16xf32, #tpu.memory_space<vmem>>, vector<1x2x8x16xf32>
    %31 = vector.shape_cast %30 : vector<1x2x8x16xf32> to vector<2x8x16xf32>
    "tpu.trace_start"() <{level = 10 : i32, message = "hqk,hkd->hqd"}> : () -> ()
    %cst_19 = arith.constant dense<0.000000e+00> : vector<2x8x16xf32>
    %32 = tpu.matmul %29, %31, %cst_19 {dimension_numbers = #tpu.dot_dimension_numbers<[2], [1], [1], [2], [0, 0, 0, 1, 1, 2], [0], [0]>} : vector<2x8x8xf32>, vector<2x8x16xf32>, vector<2x8x16xf32> -> vector<2x8x16xf32>
    "tpu.trace_stop"() : () -> ()
    %c0_20 = arith.constant 0 : index
    %c0_21 = arith.constant 0 : index
    %c0_22 = arith.constant 0 : index
    %c0_23 = arith.constant 0 : index
    %33 = vector.load %arg8[%c0_20, %c0_21, %c0_22, %c0_23] : memref<1x2x8x8xf32, #tpu.memory_space<vmem>>, vector<1x2x8x8xf32>
    %34 = vector.shape_cast %33 : vector<1x2x8x8xf32> to vector<2x8x8xf32>
    %35 = vector.shape_cast %29 : vector<2x8x8xf32> to vector<1x2x8x8xf32>
    tpu.vector_store %arg8[%c0_20, %c0_21, %c0_22, %c0_23], %35 {strides = array<i32>} : memref<1x2x8x8xf32, #tpu.memory_space<vmem>>, vector<1x2x8x8xf32>,
    %36 = vector.extract_strided_slice %32 {offsets = [0, 0, 0], sizes = [1, 8, 16], strides = [1, 1, 1]} : vector<2x8x16xf32> to vector<1x8x16xf32>
    %37 = vector.shape_cast %36 : vector<1x8x16xf32> to vector<8x16xf32>
    %c0_24 = arith.constant 0 : index
    %c0_25 = arith.constant 0 : index
    %c0_26 = arith.constant 0 : index
    %38 = vector.load %arg7[%c0_24, %c0_25, %c0_26] : memref<1x8x32xf32, #tpu.memory_space<vmem>>, vector<1x8x16xf32>
    %39 = vector.shape_cast %38 : vector<1x8x16xf32> to vector<8x16xf32>
    %40 = vector.shape_cast %37 : vector<8x16xf32> to vector<1x8x16xf32>
    tpu.vector_store %arg7[%c0_24, %c0_25, %c0_26], %40 {strides = array<i32>} : memref<1x8x32xf32, #tpu.memory_space<vmem>>, vector<1x8x16xf32>,
    %41 = vector.extract_strided_slice %32 {offsets = [1, 0, 0], sizes = [1, 8, 16], strides = [1, 1, 1]} : vector<2x8x16xf32> to vector<1x8x16xf32>
    %42 = vector.shape_cast %41 : vector<1x8x16xf32> to vector<8x16xf32>
    %c0_27 = arith.constant 0 : index
    %c0_28 = arith.constant 0 : index
    %c16 = arith.constant 16 : index
    %43 = vector.load %arg7[%c0_27, %c0_28, %c16] : memref<1x8x32xf32, #tpu.memory_space<vmem>>, vector<1x8x16xf32>
    %44 = vector.shape_cast %43 : vector<1x8x16xf32> to vector<8x16xf32>
    %45 = vector.shape_cast %42 : vector<8x16xf32> to vector<1x8x16xf32>
    tpu.vector_store %arg7[%c0_27, %c0_28, %c16], %45 {strides = array<i32>} : memref<1x8x32xf32, #tpu.memory_space<vmem>>, vector<1x8x16xf32>,
    return
  }
  func.func @transform_0(%arg0: i32, %arg1: i32, %arg2: i32) -> (i32, i32, i32, i32) {
    %c0_i32 = arith.constant 0 : i32
    %c0_i32_0 = arith.constant 0 : i32
    return %arg0, %arg1, %arg2, %c0_i32 : i32, i32, i32, i32
  }
  func.func @transform_1(%arg0: i32, %arg1: i32, %arg2: i32) -> (i32, i32, i32, i32) {
    %c0_i32 = arith.constant 0 : i32
    %c0_i32_0 = arith.constant 0 : i32
    %c0_i32_1 = arith.constant 0 : i32
    return %arg0, %arg1, %c0_i32, %c0_i32_0 : i32, i32, i32, i32
  }
  func.func @transform_2(%arg0: i32, %arg1: i32, %arg2: i32) -> (i32, i32, i32, i32) {
    %c0_i32 = arith.constant 0 : i32
    %c0_i32_0 = arith.constant 0 : i32
    %c0_i32_1 = arith.constant 0 : i32
    return %arg0, %arg1, %c0_i32, %c0_i32_0 : i32, i32, i32, i32
  }
  func.func @transform_3(%arg0: i32, %arg1: i32, %arg2: i32) -> (i32, i32, i32) {
    %c0_i32 = arith.constant 0 : i32
    %c0_i32_0 = arith.constant 0 : i32
    return %arg0, %arg2, %c0_i32 : i32, i32, i32
  }
  func.func @transform_4(%arg0: i32, %arg1: i32, %arg2: i32) -> (i32, i32, i32) {
    %c0_i32 = arith.constant 0 : i32
    return %arg0, %arg2, %arg1 : i32, i32, i32
  }
  func.func @transform_5(%arg0: i32, %arg1: i32, %arg2: i32) -> (i32, i32, i32, i32) {
    %c0_i32 = arith.constant 0 : i32
    %c0_i32_0 = arith.constant 0 : i32
    return %arg0, %arg1, %arg2, %c0_i32 : i32, i32, i32, i32
  }
}

</mosaic_0001>

<llo_original>
// kernel: tpu_custom_call.1
$region0: #{tpu_custom_call.1}
  #allocation0 [shape = 'u32[]', space=smem, size = 0x4, offset = 0x4, fixed_abs, tag = 'smem constant byte address 0x4 - core index']
  #allocation1 [shape = 'u32[144,128]{1,0:T(1,128)}', space=vmem, size = 0x12000, scoped, tag = 'internal scratch']
  %s0 = inlined_call_operand.hbm [shape: f32[2,2,8,16], index: 0, kind: input, shape index: {}]
  %s1 = inlined_call_operand.hbm [shape: f32[2,2,8,16], index: 1, kind: input, shape index: {}]
  %s2 = inlined_call_operand.hbm [shape: f32[2,2,8,16], index: 2, kind: input, shape index: {}]
  %s3 = inlined_call_operand.vmem [shape: s8[2,8,8], index: 3, kind: input, shape index: {}]
  %s4 = inlined_call_operand.hbm [shape: f32[2,8,32], index: 4, kind: output, shape index: {0}]
  %s5 = inlined_call_operand.hbm [shape: f32[2,2,8,8], index: 5, kind: output, shape index: {1}]
  %6 = xla_tuple %s4, %s5
  %s7 = sld [smem:[#allocation0]]
  $region69: #{tpu_custom_call.1} parent=0
    _
  %s9 = ssub.s32 1, %s7
  %s10 = scalar_select 0, %s9, %s7
  $region1: #{tpu_custom_call.1} parent=0
    #allocation2 [shape = 'u8[16384]{0}', space=vmem, size = 0x4000, scoped, tag = 'input window, operand 0']
    #allocation3 [shape = 's32[2]{0}', space=sflag, size = 0x8, scoped, tag = 'scoped memory for tpu_custom_call.1']
    #allocation4 [shape = 's32[2]{0}', space=sflag, size = 0x8, scoped, tag = 'scoped memory for tpu_custom_call.1']
    #allocation5 [shape = 'u8[16384]{0}', space=vmem, size = 0x4000, scoped, tag = 'input window, operand 1']
    #allocation6 [shape = 's32[2]{0}', space=sflag, size = 0x8, scoped, tag = 'scoped memory for tpu_custom_call.1']
    #allocation7 [shape = 'u8[16384]{0}', space=vmem, size = 0x4000, scoped, tag = 'input window, operand 2']
    #allocation8 [shape = 'u8[8192]{0}', space=vmem, size = 0x2000, scoped, tag = 'output window, operand 0']
    #allocation9 [shape = 'u8[16384]{0}', space=vmem, size = 0x4000, scoped, tag = 'output window, operand 1']
    #allocation10 [shape = 's32[2]{0}', space=sflag, size = 0x8, scoped, tag = 'scoped memory for tpu_custom_call.1']
    %11 = vsyncpa [#allocation3], 0
    %s12 = scalar_lea.sflag [#allocation3], 1
    %13 = vsyncpa %s12, 0
    %14 = vsyncpa [#allocation6], 0
    %s15 = scalar_lea.sflag [#allocation6], 1
    %16 = vsyncpa %s15, 0
    %17 = vsyncpa [#allocation4], 0
    %s18 = scalar_lea.sflag [#allocation4], 1
    %19 = vsyncpa %s18, 0
    %20 = vsyncpa [#allocation10], 0
    %s21 = scalar_lea.sflag [#allocation10], 1
    %22 = vsyncpa %s21, 0
    loop: start=0, step=1, limit=4
    $region2: #{tpu_custom_call.1} parent=1 // loop_pre_header
      _
    $region3: #{tpu_custom_call.1} parent=1 // loop_header
      %s24 = sphi 0, %s28
      %p25 = scmp.ge.s32.totalorder %s24, 4
      %s31 = sphi 0, %s50
      %s32 = sphi 0, %s46
      %s33 = sphi 0, %s42
      %s34 = sphi 0, %s31
      %s35 = sphi 0, %s32
      %s36 = sphi 0, %s33
      %s37 = sphi 0, %s34
      %s38 = sphi 0, %s35
      %s39 = sphi 0, %s36
      %s57 = sphi 0, %s59
      %s60 = sphi 0, %s57
      %s61 = sphi 0, %s60
      %s77 = sphi 0, %s61
      %s85 = sphi 0, %s87
      %s88 = sphi 0, %s85
      %s89 = sphi 0, %s88
      %s105 = sphi 0, %s89
      %s113 = sphi 0, %s115
      %s116 = sphi 0, %s113
      %s117 = sphi 0, %s116
      %s133 = sphi 0, %s117
      %s141 = sphi 0, %s143
      %s144 = sphi 0, %s141
      %s145 = sphi 0, %s144
      %s161 = sphi 0, %s145
      %s171 = sphi 0, %s173
      %s174 = sphi 0, %s171
      %s175 = sphi 0, %s174
      %s191 = sphi 0, %s175
      %s201 = sphi 0, %s203
      %s204 = sphi 0, %s201
      %s205 = sphi 0, %s204
      %s221 = sphi 0, %s205
    $region4: #{tpu_custom_call.1} parent=1 // loop_header_branch
      %27 = sbr.rel (%p25) target = $region8
    $region5: #{tpu_custom_call.1} parent=1 // loop_body
      %s29 = ssub.s32 %s24, 1
      %s30 = ssub.s32 %s24, 2
      %s40 = sadd.s32 1, %s33
      %p41 = scmp.ge.s32.totalorder %s40, 1
      %s42 = scalar_select %p41, 0, %s40
      %s43 = sadd.s32 1, %s32
      %s44 = scalar_select %p41, %s43, %s32
      %p45 = scmp.ge.s32.totalorder %s44, 1
      %s46 = scalar_select %p45, 0, %s44
      %s47 = sadd.s32 1, %s31
      %s48 = scalar_select %p45, %s47, %s31
      %p49 = scmp.ge.s32.totalorder %s48, 2
      %s50 = scalar_select %p49, 0, %s48
      %s51 = ssub.s32 %s31, %s50
      %s52 = ssub.s32 %s32, %s46
      %s53 = sor.u32 %s51, %s52
      %s54 = ssub.s32 %s33, %s42
      %s55 = sor.u32 %s53, %s54
      %p56 = scmp.eq.s32.totalorder %s55, 0
      %s58 = sadd.s32 %s57, 1
      %s59 = scalar_select %p56, %s57, %s58
      %p62 = pneg %p56
      %p63 = scmp.eq.s32.totalorder %s24, 1
      %p64 = por %p62, %p63
      %p65 = scmp.ne.s32.totalorder %s57, %s60
      %p66 = scmp.eq.s32.totalorder %s24, 0
      %p67 = por %p65, %p66
      %p68 = scmp.ne.s32.totalorder %s57, %s60
      %p69 = scmp.eq.s32.totalorder %s29, 1
      %p70 = por %p68, %p69
      %p71 = scmp.ne.s32.totalorder %s60, %s61
      %p72 = scmp.eq.s32.totalorder %s29, 0
      %p73 = por %p71, %p72
      %p74 = scmp.ne.s32.totalorder %s60, %s61
      %p75 = scmp.eq.s32.totalorder %s30, 1
      %p76 = por %p74, %p75
      %p78 = scmp.ne.s32.totalorder %s61, %s77
      %p79 = scmp.eq.s32.totalorder %s30, 0
      %p80 = por %p78, %p79
      %s81 = ssub.s32 %s31, %s50
      %s82 = ssub.s32 %s32, %s46
      %s83 = sor.u32 %s81, %s82
      %p84 = scmp.eq.s32.totalorder %s83, 0
      %s86 = sadd.s32 %s85, 1
      %s87 = scalar_select %p84, %s85, %s86
      %p90 = pneg %p84
      %p91 = scmp.eq.s32.totalorder %s24, 1
      %p92 = por %p90, %p91
      %p93 = scmp.ne.s32.totalorder %s85, %s88
      %p94 = scmp.eq.s32.totalorder %s24, 0
      %p95 = por %p93, %p94
      %p96 = scmp.ne.s32.totalorder %s85, %s88
      %p97 = scmp.eq.s32.totalorder %s29, 1
      %p98 = por %p96, %p97
      %p99 = scmp.ne.s32.totalorder %s88, %s89
      %p100 = scmp.eq.s32.totalorder %s29, 0
      %p101 = por %p99, %p100
      %p102 = scmp.ne.s32.totalorder %s88, %s89
      %p103 = scmp.eq.s32.totalorder %s30, 1
      %p104 = por %p102, %p103
      %p106 = scmp.ne.s32.totalorder %s89, %s105
      %p107 = scmp.eq.s32.totalorder %s30, 0
      %p108 = por %p106, %p107
      %s109 = ssub.s32 %s31, %s50
      %s110 = ssub.s32 %s32, %s46
      %s111 = sor.u32 %s109, %s110
      %p112 = scmp.eq.s32.totalorder %s111, 0
      %s114 = sadd.s32 %s113, 1
      %s115 = scalar_select %p112, %s113, %s114
      %p118 = pneg %p112
      %p119 = scmp.eq.s32.totalorder %s24, 1
      %p120 = por %p118, %p119
      %p121 = scmp.ne.s32.totalorder %s113, %s116
      %p122 = scmp.eq.s32.totalorder %s24, 0
      %p123 = por %p121, %p122
      %p124 = scmp.ne.s32.totalorder %s113, %s116
      %p125 = scmp.eq.s32.totalorder %s29, 1
      %p126 = por %p124, %p125
      %p127 = scmp.ne.s32.totalorder %s116, %s117
      %p128 = scmp.eq.s32.totalorder %s29, 0
      %p129 = por %p127, %p128
      %p130 = scmp.ne.s32.totalorder %s116, %s117
      %p131 = scmp.eq.s32.totalorder %s30, 1
      %p132 = por %p130, %p131
      %p134 = scmp.ne.s32.totalorder %s117, %s133
      %p135 = scmp.eq.s32.totalorder %s30, 0
      %p136 = por %p134, %p135
      %s137 = ssub.s32 %s31, %s50
      %s138 = ssub.s32 %s33, %s42
      %s139 = sor.u32 %s137, %s138
      %p140 = scmp.eq.s32.totalorder %s139, 0
      %s142 = sadd.s32 %s141, 1
      %s143 = scalar_select %p140, %s141, %s142
      %p146 = pneg %p140
      %p147 = scmp.eq.s32.totalorder %s24, 1
      %p148 = por %p146, %p147
      %p149 = scmp.ne.s32.totalorder %s141, %s144
      %p150 = scmp.eq.s32.totalorder %s24, 0
      %p151 = por %p149, %p150
      %p152 = scmp.ne.s32.totalorder %s141, %s144
      %p153 = scmp.eq.s32.totalorder %s29, 1
      %p154 = por %p152, %p153
      %p155 = scmp.ne.s32.totalorder %s144, %s145
      %p156 = scmp.eq.s32.totalorder %s29, 0
      %p157 = por %p155, %p156
      %p158 = scmp.ne.s32.totalorder %s144, %s145
      %p159 = scmp.eq.s32.totalorder %s30, 1
      %p160 = por %p158, %p159
      %p162 = scmp.ne.s32.totalorder %s145, %s161
      %p163 = scmp.eq.s32.totalorder %s30, 0
      %p164 = por %p162, %p163
      %s165 = ssub.s32 %s31, %s50
      %s166 = ssub.s32 %s33, %s42
      %s167 = sor.u32 %s165, %s166
      %s168 = ssub.s32 %s32, %s46
      %s169 = sor.u32 %s167, %s168
      %p170 = scmp.eq.s32.totalorder %s169, 0
      %s172 = sadd.s32 %s171, 1
      %s173 = scalar_select %p170, %s171, %s172
      %p176 = pneg %p170
      %p177 = scmp.eq.s32.totalorder %s24, 1
      %p178 = por %p176, %p177
      %p179 = scmp.ne.s32.totalorder %s171, %s174
      %p180 = scmp.eq.s32.totalorder %s24, 0
      %p181 = por %p179, %p180
      %p182 = scmp.ne.s32.totalorder %s171, %s174
      %p183 = scmp.eq.s32.totalorder %s29, 1
      %p184 = por %p182, %p183
      %p185 = scmp.ne.s32.totalorder %s174, %s175
      %p186 = scmp.eq.s32.totalorder %s29, 0
      %p187 = por %p185, %p186
      %p188 = scmp.ne.s32.totalorder %s174, %s175
      %p189 = scmp.eq.s32.totalorder %s30, 1
      %p190 = por %p188, %p189
      %p192 = scmp.ne.s32.totalorder %s175, %s191
      %p193 = scmp.eq.s32.totalorder %s30, 0
      %p194 = por %p192, %p193
      %s195 = ssub.s32 %s31, %s50
      %s196 = ssub.s32 %s32, %s46
      %s197 = sor.u32 %s195, %s196
      %s198 = ssub.s32 %s33, %s42
      %s199 = sor.u32 %s197, %s198
      %p200 = scmp.eq.s32.totalorder %s199, 0
      %s202 = sadd.s32 %s201, 1
      %s203 = scalar_select %p200, %s201, %s202
      %p206 = pneg %p200
      %p207 = scmp.eq.s32.totalorder %s24, 1
      %p208 = por %p206, %p207
      %p209 = scmp.ne.s32.totalorder %s201, %s204
      %p210 = scmp.eq.s32.totalorder %s24, 0
      %p211 = por %p209, %p210
      %p212 = scmp.ne.s32.totalorder %s201, %s204
      %p213 = scmp.eq.s32.totalorder %s29, 1
      %p214 = por %p212, %p213
      %p215 = scmp.ne.s32.totalorder %s204, %s205
      %p216 = scmp.eq.s32.totalorder %s29, 0
      %p217 = por %p215, %p216
      %p218 = scmp.ne.s32.totalorder %s204, %s205
      %p219 = scmp.eq.s32.totalorder %s30, 1
      %p220 = por %p218, %p219
      %p222 = scmp.ne.s32.totalorder %s205, %s221
      %p223 = scmp.eq.s32.totalorder %s30, 0
      %p224 = por %p222, %p223
      %p225 = scmp.le.s32.totalorder 1, %s24
      %p226 = scmp.lt.s32.totalorder %s24, 3
      %p227 = pnand %p225, %p226
      %p228 = pneg %p227
      // Predicated region
      $region9: #{tpu_custom_call.1} parent=5 // pred_check
        _
      $region10: #{tpu_custom_call.1} parent=5 // pred_check_branch
        %230 = sbr.rel (%p227) target = $region12
      $region11: #{tpu_custom_call.1} parent=5 // pred_region
        %s231 = ssub.s32 %s24, 1
      $region12: #{tpu_custom_call.1} parent=5 // pred_fallthru
        _
      %p232 = scmp.lt.s32.totalorder %s24, 2
      // Predicated region
      $region13: #{tpu_custom_call.1} parent=5 // pred_check
        %p233 = pneg %p232
      $region14: #{tpu_custom_call.1} parent=5 // pred_check_branch
        %235 = sbr.rel (%p233) target = $region16
      $region15: #{tpu_custom_call.1} parent=5 // pred_region
        // Predicated region
        $region17: #{tpu_custom_call.1} parent=15 // pred_check
          %p236 = pneg %p67
        $region18: #{tpu_custom_call.1} parent=15 // pred_check_branch
          %238 = sbr.rel (%p236) target = $region20
        $region19: #{tpu_custom_call.1} parent=15 // pred_region
          %s239 = sand.u32 %s57, 1
          %s240 = scalar_lea.sflag [#allocation3], %s239
          %s241 = sand.u32 %s57, 1
          %s242 = smul.addr %s241, 16
          %s243 = scalar_lea.vmem [#allocation2], %s242
          %s244 = smul.u32 2, %s32
          %s246 = ssub.s32 256, 256
          %247 = vsyncadd %s240, %s246
          %s248 = sadd.s32 %s33, %s244
          %s249 = smul.addr %s31, 2
          %s250 = sadd.s32 %s248, %s249
          %s251 = smul.addr %s250, 128
          %s252 = scalar_lea.hbm %s0, %s251
          %s253 = sshll.u32 %s243, 4
          %s254 = int_to_ptr.vmem [resolvable:$true] %s253
          %259 = dma.hbm_to_vmem [thread:$0]  %s252, 256, %s254, %s240, 128, 128, 8
        $region20: #{tpu_custom_call.1} parent=15 // pred_fallthru
          _
        // Predicated region
        $region21: #{tpu_custom_call.1} parent=15 // pred_check
          %p260 = pneg %p95
        $region22: #{tpu_custom_call.1} parent=15 // pred_check_branch
          %262 = sbr.rel (%p260) target = $region24
        $region23: #{tpu_custom_call.1} parent=15 // pred_region
          %s263 = sand.u32 %s24, 1
          %s264 = scalar_lea.sflag [#allocation6], %s263
          %s265 = sand.u32 %s85, 1
          %s266 = smul.addr %s265, 16
          %s267 = scalar_lea.vmem [#allocation5], %s266
          %s268 = smul.u32 2, %s32
          %s270 = ssub.s32 256, 256
          %271 = vsyncadd %s264, %s270
          %s272 = smul.addr %s31, 2
          %s273 = sadd.s32 %s268, %s272
          %s274 = smul.addr %s273, 128
          %s275 = scalar_lea.hbm %s1, %s274
          %s276 = sshll.u32 %s267, 4
          %s277 = int_to_ptr.vmem [resolvable:$true] %s276
          %282 = dma.hbm_to_vmem [thread:$0]  %s275, 256, %s277, %s264, 128, 128, 8
        $region24: #{tpu_custom_call.1} parent=15 // pred_fallthru
          _
        // Predicated region
        $region25: #{tpu_custom_call.1} parent=15 // pred_check
          %p283 = pneg %p123
        $region26: #{tpu_custom_call.1} parent=15 // pred_check_branch
          %285 = sbr.rel (%p283) target = $region28
        $region27: #{tpu_custom_call.1} parent=15 // pred_region
          %s286 = sand.u32 %s24, 1
          %s287 = scalar_lea.sflag [#allocation6], %s286
          %s288 = sand.u32 %s113, 1
          %s289 = smul.addr %s288, 16
          %s290 = scalar_lea.vmem [#allocation7], %s289
          %s291 = smul.u32 2, %s32
          %s293 = ssub.s32 256, 256
          %294 = vsyncadd %s287, %s293
          %s295 = smul.addr %s31, 2
          %s296 = sadd.s32 %s291, %s295
          %s297 = smul.addr %s296, 128
          %s298 = scalar_lea.hbm %s2, %s297
          %s299 = sshll.u32 %s290, 4
          %s300 = int_to_ptr.vmem [resolvable:$true] %s299
          %305 = dma.hbm_to_vmem [thread:$0]  %s298, 256, %s300, %s287, 128, 128, 8
        $region28: #{tpu_custom_call.1} parent=15 // pred_fallthru
          _
        // Predicated region
        $region29: #{tpu_custom_call.1} parent=15 // pred_check
          %p306 = pneg %p151
        $region30: #{tpu_custom_call.1} parent=15 // pred_check_branch
          %308 = sbr.rel (%p306) target = $region32
        $region31: #{tpu_custom_call.1} parent=15 // pred_region
          %p309 = scmp.lt.s32.totalorder %s31, 1
          %s310 = scalar_select %p309, %s31, 1
          %p311 = scmp.lt.s32.totalorder %s33, 0
          %s312 = scalar_select %p311, %s33, 0
          %s313 = sadd.s32 %s312, %s310
          %s314 = smul.addr %s313, 2
          %s315 = scalar_lea.vmem %s3, %s314
        $region32: #{tpu_custom_call.1} parent=15 // pred_fallthru
          _
      $region16: #{tpu_custom_call.1} parent=5 // pred_fallthru
        _
      %p316 = scmp.le.s32.totalorder 1, %s24
      %p317 = scmp.lt.s32.totalorder %s24, 3
      %p318 = pnand %p316, %p317
      %p319 = pneg %p318
      // Predicated region
      $region33: #{tpu_custom_call.1} parent=5 // pred_check
        _
      $region34: #{tpu_custom_call.1} parent=5 // pred_check_branch
        %321 = sbr.rel (%p318) target = $region36
      $region35: #{tpu_custom_call.1} parent=5 // pred_region
        %s322 = ssub.s32 %s24, 1
        %s323 = sand.u32 %s60, 1
        %s324 = scalar_lea.sflag [#allocation3], %s323
        %s325 = sand.u32 %s60, 1
        %s326 = smul.addr %s325, 16
        %s327 = scalar_lea.vmem [#allocation2], %s326
        // Predicated region
        $region37: #{tpu_custom_call.1} parent=35 // pred_check
          %p328 = pneg %p73
        $region38: #{tpu_custom_call.1} parent=35 // pred_check_branch
          %330 = sbr.rel (%p328) target = $region40
        $region39: #{tpu_custom_call.1} parent=35 // pred_region
          %331 = dma.done %s324, 256
        $region40: #{tpu_custom_call.1} parent=35 // pred_fallthru
          _
        %s332 = sand.u32 %s29, 1
        %s333 = scalar_lea.sflag [#allocation6], %s332
        %s334 = sand.u32 %s88, 1
        %s335 = smul.addr %s334, 16
        %s336 = scalar_lea.vmem [#allocation5], %s335
        // Predicated region
        $region41: #{tpu_custom_call.1} parent=35 // pred_check
          %p337 = pneg %p101
        $region42: #{tpu_custom_call.1} parent=35 // pred_check_branch
          %339 = sbr.rel (%p337) target = $region44
        $region43: #{tpu_custom_call.1} parent=35 // pred_region
          %340 = dma.done %s333, 256
        $region44: #{tpu_custom_call.1} parent=35 // pred_fallthru
          _
        %s341 = sand.u32 %s29, 1
        %s342 = scalar_lea.sflag [#allocation6], %s341
        %s343 = sand.u32 %s116, 1
        %s344 = smul.addr %s343, 16
        %s345 = scalar_lea.vmem [#allocation7], %s344
        // Predicated region
        $region45: #{tpu_custom_call.1} parent=35 // pred_check
          %p346 = pneg %p129
        $region46: #{tpu_custom_call.1} parent=35 // pred_check_branch
          %348 = sbr.rel (%p346) target = $region48
        $region47: #{tpu_custom_call.1} parent=35 // pred_region
          %349 = dma.done %s342, 256
        $region48: #{tpu_custom_call.1} parent=35 // pred_fallthru
          _
        %s350 = sand.u32 %s60, 1
        %s351 = scalar_lea.sflag [#allocation3], %s350
        %s352 = sand.u32 %s60, 1
        %s353 = smul.addr %s352, 16
        %s354 = scalar_lea.vmem [#allocation2], %s353
        %p355 = pneg %p73
        %p356 = pneg %p70
        %s357 = sand.u32 %s29, 1
        %s358 = scalar_lea.sflag [#allocation6], %s357
        %s359 = sand.u32 %s88, 1
        %s360 = smul.addr %s359, 16
        %s361 = scalar_lea.vmem [#allocation5], %s360
        %p362 = pneg %p101
        %p363 = pneg %p98
        %s364 = sand.u32 %s29, 1
        %s365 = scalar_lea.sflag [#allocation6], %s364
        %s366 = sand.u32 %s116, 1
        %s367 = smul.addr %s366, 16
        %s368 = scalar_lea.vmem [#allocation7], %s367
        %p369 = pneg %p129
        %p370 = pneg %p126
        %p371 = scmp.lt.s32.totalorder %s34, 1
        %s372 = scalar_select %p371, %s34, 1
        %p373 = scmp.lt.s32.totalorder %s36, 0
        %s374 = scalar_select %p373, %s36, 0
        %s375 = sadd.s32 %s374, %s372
        %s376 = smul.addr %s375, 2
        %s377 = scalar_lea.vmem %s3, %s376
        %p378 = pneg %p157
        %p379 = pneg %p154
        %p380 = pneg %p187
        %p381 = pneg %p184
        %s382 = sand.u32 %s174, 1
        %s383 = scalar_lea.sflag [#allocation4], %s382
        %s384 = sand.u32 %s174, 1
        %s385 = smul.addr %s384, 8
        %s386 = scalar_lea.vmem [#allocation8], %s385
        %p387 = pneg %p217
        %p388 = pneg %p214
        %s389 = sand.u32 %s204, 1
        %s390 = scalar_lea.sflag [#allocation10], %s389
        %s391 = sand.u32 %s204, 1
        %s392 = smul.addr %s391, 16
        %s393 = scalar_lea.vmem [#allocation9], %s392
        %s394 = smul.u32 2, %s35
        %s395 = smul.u32 2, %s35
        %s396 = smul.u32 2, %s35
        %p397 = scmp.lt.s32.totalorder %s34, 1
        %s398 = scalar_select %p397, %s34, 1
        %p399 = scmp.lt.s32.totalorder %s36, 0
        %s400 = scalar_select %p399, %s36, 0
        %s401 = sadd.s32 %s400, %s398
        %s402 = smul.addr %s401, 2
        %s403 = scalar_lea.vmem %s3, %s402
        %s404 = smul.u32 2, %s35
        %v407 = vld [vmem:[%s327] sm:$0xff]
        %v408 = vld [vmem:[%s327 + $0x8] sm:$0xff]
        %v409 = vmul.f32 %v407, 0.25
        %v410 = vmul.f32 %v408, 0.25
        %v411 = vld [vmem:[%s336] sm:$0xff]
        %v412 = vld [vmem:[%s336 + $0x8] sm:$0xff]
        %vm413 = vcmask 130048
        %v415 = vsel %vm413, %v409, 0
        %v418 = vsel %vm413, %v411, 0
        %420 = vmatprep.subr.mxu0 0.0
        %421 = vmatpush1.xpose.msra.mxu0 0.0
        %422 = vmatprep.subr.mxu0 0.0
        %423 = vmatpush1.xpose.msra.mxu0 0.0
        %424 = vmatprep.subr.mxu0 0.0
        %425 = vmatpush1.xpose.msra.mxu0 0.0
        %426 = vmatprep.subr.mxu0 0.0
        %427 = vmatpush1.xpose.msra.mxu0 0.0
        %428 = vmatprep.subr.mxu0 0.0
        %429 = vmatpush1.xpose.msra.mxu0 0.0
        %430 = vmatprep.subr.mxu0 0.0
        %431 = vmatpush1.xpose.msra.mxu0 0.0
        %432 = vmatprep.subr.mxu0 0.0
        %433 = vmatpush1.xpose.msra.mxu0 0.0
        %434 = vmatprep.subr.mxu0 0.0
        %435 = vmatpush1.xpose.msra.mxu0 0.0
        %436 = vmatprep.subr.mxu0 0.0
        %437 = vmatpush1.xpose.msra.mxu0 0.0
        %438 = vmatprep.subr.mxu0 0.0
        %439 = vmatpush1.xpose.msra.mxu0 0.0
        %440 = vmatprep.subr.mxu0 0.0
        %441 = vmatpush1.xpose.msra.mxu0 0.0
        %442 = vmatprep.subr.mxu0 0.0
        %443 = vmatpush1.xpose.msra.mxu0 0.0
        %444 = vmatprep.subr.mxu0 0.0
        %445 = vmatpush1.xpose.msra.mxu0 0.0
        %446 = vmatprep.subr.mxu0 0.0
        %447 = vmatpush1.xpose.msra.mxu0 0.0
        %448 = vmatprep.subr.mxu0 0.0
        %449 = vmatpush1.xpose.msra.mxu0 0.0
        %450 = vmatprep.subr.mxu0 0.0
        %451 = vmatpush1.xpose.msra.mxu0 %v418
        %452 = vmatprep.subr.mxu0 0.0
        %453 = vmatpush2.xpose.msra.mxu0 0.0
        %454 = vmatprep.subr.mxu0 0.0
        %455 = vmatpush2.xpose.msra.mxu0 0.0
        %456 = vmatprep.subr.mxu0 0.0
        %457 = vmatpush2.xpose.msra.mxu0 0.0
        %458 = vmatprep.subr.mxu0 0.0
        %459 = vmatpush2.xpose.msra.mxu0 0.0
        %460 = vmatprep.subr.mxu0 0.0
        %461 = vmatpush2.xpose.msra.mxu0 0.0
        %462 = vmatprep.subr.mxu0 0.0
        %463 = vmatpush2.xpose.msra.mxu0 0.0
        %464 = vmatprep.subr.mxu0 0.0
        %465 = vmatpush2.xpose.msra.mxu0 0.0
        %466 = vmatprep.subr.mxu0 0.0
        %467 = vmatpush2.xpose.msra.mxu0 0.0
        %468 = vmatprep.subr.mxu0 0.0
        %469 = vmatpush2.xpose.msra.mxu0 0.0
        %470 = vmatprep.subr.mxu0 0.0
        %471 = vmatpush2.xpose.msra.mxu0 0.0
        %472 = vmatprep.subr.mxu0 0.0
        %473 = vmatpush2.xpose.msra.mxu0 0.0
        %474 = vmatprep.subr.mxu0 0.0
        %475 = vmatpush2.xpose.msra.mxu0 0.0
        %476 = vmatprep.subr.mxu0 0.0
        %477 = vmatpush2.xpose.msra.mxu0 0.0
        %478 = vmatprep.subr.mxu0 0.0
        %479 = vmatpush2.xpose.msra.mxu0 0.0
        %480 = vmatprep.subr.mxu0 0.0
        %481 = vmatpush2.xpose.msra.mxu0 0.0
        %482 = vmatprep.subr.mxu0 0.0
        %483 = vmatpush2.xpose.msra.mxu0 0.0
        %484 = vmatprep.mubr.f32.mxu0 0.0
        %485 = vmatmul.mubr.f32.gmra.mxu0 %v415
        %v486 = vpop.f32.mrf.mxu0
        %v487 = vadd.f32 0.0, %v486
        %v488 = vpop.f32.mrf.mxu0
        %489 = vdwg.mxu0
        %v491 = vsel %vm413, %v410, 0
        %v494 = vsel %vm413, %v412, 0
        %496 = vmatprep.subr.mxu0 0.0
        %497 = vmatpush1.xpose.msra.mxu0 0.0
        %498 = vmatprep.subr.mxu0 0.0
        %499 = vmatpush1.xpose.msra.mxu0 0.0
        %500 = vmatprep.subr.mxu0 0.0
        %501 = vmatpush1.xpose.msra.mxu0 0.0
        %502 = vmatprep.subr.mxu0 0.0
        %503 = vmatpush1.xpose.msra.mxu0 0.0
        %504 = vmatprep.subr.mxu0 0.0
        %505 = vmatpush1.xpose.msra.mxu0 0.0
        %506 = vmatprep.subr.mxu0 0.0
        %507 = vmatpush1.xpose.msra.mxu0 0.0
        %508 = vmatprep.subr.mxu0 0.0
        %509 = vmatpush1.xpose.msra.mxu0 0.0
        %510 = vmatprep.subr.mxu0 0.0
        %511 = vmatpush1.xpose.msra.mxu0 0.0
        %512 = vmatprep.subr.mxu0 0.0
        %513 = vmatpush1.xpose.msra.mxu0 0.0
        %514 = vmatprep.subr.mxu0 0.0
        %515 = vmatpush1.xpose.msra.mxu0 0.0
        %516 = vmatprep.subr.mxu0 0.0
        %517 = vmatpush1.xpose.msra.mxu0 0.0
        %518 = vmatprep.subr.mxu0 0.0
        %519 = vmatpush1.xpose.msra.mxu0 0.0
        %520 = vmatprep.subr.mxu0 0.0
        %521 = vmatpush1.xpose.msra.mxu0 0.0
        %522 = vmatprep.subr.mxu0 0.0
        %523 = vmatpush1.xpose.msra.mxu0 0.0
        %524 = vmatprep.subr.mxu0 0.0
        %525 = vmatpush1.xpose.msra.mxu0 0.0
        %526 = vmatprep.subr.mxu0 0.0
        %527 = vmatpush1.xpose.msra.mxu0 %v494
        %528 = vmatprep.subr.mxu0 0.0
        %529 = vmatpush2.xpose.msra.mxu0 0.0
        %530 = vmatprep.subr.mxu0 0.0
        %531 = vmatpush2.xpose.msra.mxu0 0.0
        %532 = vmatprep.subr.mxu0 0.0
        %533 = vmatpush2.xpose.msra.mxu0 0.0
        %534 = vmatprep.subr.mxu0 0.0
        %535 = vmatpush2.xpose.msra.mxu0 0.0
        %536 = vmatprep.subr.mxu0 0.0
        %537 = vmatpush2.xpose.msra.mxu0 0.0
        %538 = vmatprep.subr.mxu0 0.0
        %539 = vmatpush2.xpose.msra.mxu0 0.0
        %540 = vmatprep.subr.mxu0 0.0
        %541 = vmatpush2.xpose.msra.mxu0 0.0
        %542 = vmatprep.subr.mxu0 0.0
        %543 = vmatpush2.xpose.msra.mxu0 0.0
        %544 = vmatprep.subr.mxu0 0.0
        %545 = vmatpush2.xpose.msra.mxu0 0.0
        %546 = vmatprep.subr.mxu0 0.0
        %547 = vmatpush2.xpose.msra.mxu0 0.0
        %548 = vmatprep.subr.mxu0 0.0
        %549 = vmatpush2.xpose.msra.mxu0 0.0
        %550 = vmatprep.subr.mxu0 0.0
        %551 = vmatpush2.xpose.msra.mxu0 0.0
        %552 = vmatprep.subr.mxu0 0.0
        %553 = vmatpush2.xpose.msra.mxu0 0.0
        %554 = vmatprep.subr.mxu0 0.0
        %555 = vmatpush2.xpose.msra.mxu0 0.0
        %556 = vmatprep.subr.mxu0 0.0
        %557 = vmatpush2.xpose.msra.mxu0 0.0
        %558 = vmatprep.subr.mxu0 0.0
        %559 = vmatpush2.xpose.msra.mxu0 0.0
        %560 = vmatprep.mubr.f32.mxu0 0.0
        %561 = vmatmul.mubr.f32.gmra.mxu0 %v491
        %v562 = vpop.f32.mrf.mxu0
        %v563 = vadd.f32 0.0, %v562
        %v564 = vpop.f32.mrf.mxu0
        %565 = vdwg.mxu0
        %v566 = vld [vmem:[%s403] sm:$0x3]
        %vm567 = vnez %v566
        %v568 = vsel %vm567, 16843009, 0
        %v569 = vunpack.c.0.s8 %v568
        %vm570 = vcmp.ne.s32.totalorder %v569, 0
        %v571 = vsel %vm570, 1, 0
        %vm572 = vcmp.eq.s32.totalorder %v571, 1
        %v573 = vsel %vm572, -1e+09, %v487
        %v574 = vsel %vm572, -1e+09, %v563
        %vm575 = vcmask 64512
        %v576 = vsel %vm575, %v573, -inf
        %577 = vmax.xlane.f32.xlu0 %v576
        %v578 = vpop.xlane.xlu0 %577
        %v579 = vsel %vm575, %v574, -inf
        %580 = vmax.xlane.f32.xlu0 %v579
        %v581 = vpop.xlane.xlu0 %580
        %v582 = vsub.f32 %v573, %v578
        %v583 = vsub.f32 %v574, %v581
        %v584 = vmul.f32 %v582, 1.442695
        %v585 = vpow.pop %v584
        %v586 = vmul.f32 %v583, 1.442695
        %v587 = vpow.pop %v586
        %v588 = vsel %vm575, %v585, 0.0
        %589 = vadd.xlane.f32.xlu0 %v588
        %v590 = vpop.xlane.xlu0 %589
        %v591 = vsel %vm575, %v587, 0.0
        %592 = vadd.xlane.f32.xlu0 %v591
        %v593 = vpop.xlane.xlu0 %592
        %v594 = vrcp.pop %v590
        %v595 = vrcp.pop %v593
        %v596 = vmul.f32 %v590, %v594
        %v597 = vmul.f32 %v593, %v595
        %v598 = vsub.f32 2.0, %v596
        %v599 = vsub.f32 2.0, %v597
        %v600 = vmul.f32 %v594, %v598
        %v601 = vmul.f32 %v595, %v599
        %v602 = vmul.f32 %v585, %v600
        %v603 = vmul.f32 %v587, %v601
        %v604 = vld [vmem:[%s345] sm:$0xff]
        %v605 = vld [vmem:[%s345 + $0x8] sm:$0xff]
        %v607 = vsel %vm575, %v602, 0
        %609 = vmatprep.subr.mxu0 0.0
        %610 = vmatpush1.msra.mxu0 0.0
        %611 = vmatprep.subr.mxu0 0.0
        %612 = vmatpush1.msra.mxu0 0.0
        %613 = vmatprep.subr.mxu0 0.0
        %614 = vmatpush1.msra.mxu0 0.0
        %615 = vmatprep.subr.mxu0 0.0
        %616 = vmatpush1.msra.mxu0 0.0
        %617 = vmatprep.subr.mxu0 0.0
        %618 = vmatpush1.msra.mxu0 0.0
        %619 = vmatprep.subr.mxu0 0.0
        %620 = vmatpush1.msra.mxu0 0.0
        %621 = vmatprep.subr.mxu0 0.0
        %622 = vmatpush1.msra.mxu0 0.0
        %623 = vmatprep.subr.mxu0 0.0
        %624 = vmatpush1.msra.mxu0 0.0
        %625 = vmatprep.subr.mxu0 0.0
        %626 = vmatpush1.msra.mxu0 0.0
        %627 = vmatprep.subr.mxu0 0.0
        %628 = vmatpush1.msra.mxu0 0.0
        %629 = vmatprep.subr.mxu0 0.0
        %630 = vmatpush1.msra.mxu0 0.0
        %631 = vmatprep.subr.mxu0 0.0
        %632 = vmatpush1.msra.mxu0 0.0
        %633 = vmatprep.subr.mxu0 0.0
        %634 = vmatpush1.msra.mxu0 0.0
        %635 = vmatprep.subr.mxu0 0.0
        %636 = vmatpush1.msra.mxu0 0.0
        %637 = vmatprep.subr.mxu0 0.0
        %638 = vmatpush1.msra.mxu0 0.0
        %639 = vmatprep.subr.mxu0 0.0
        %640 = vmatpush1.msra.mxu0 %v604
        %641 = vmatprep.subr.mxu0 0.0
        %642 = vmatpush2.msra.mxu0 0.0
        %643 = vmatprep.subr.mxu0 0.0
        %644 = vmatpush2.msra.mxu0 0.0
        %645 = vmatprep.subr.mxu0 0.0
        %646 = vmatpush2.msra.mxu0 0.0
        %647 = vmatprep.subr.mxu0 0.0
        %648 = vmatpush2.msra.mxu0 0.0
        %649 = vmatprep.subr.mxu0 0.0
        %650 = vmatpush2.msra.mxu0 0.0
        %651 = vmatprep.subr.mxu0 0.0
        %652 = vmatpush2.msra.mxu0 0.0
        %653 = vmatprep.subr.mxu0 0.0
        %654 = vmatpush2.msra.mxu0 0.0
        %655 = vmatprep.subr.mxu0 0.0
        %656 = vmatpush2.msra.mxu0 0.0
        %657 = vmatprep.subr.mxu0 0.0
        %658 = vmatpush2.msra.mxu0 0.0
        %659 = vmatprep.subr.mxu0 0.0
        %660 = vmatpush2.msra.mxu0 0.0
        %661 = vmatprep.subr.mxu0 0.0
        %662 = vmatpush2.msra.mxu0 0.0
        %663 = vmatprep.subr.mxu0 0.0
        %664 = vmatpush2.msra.mxu0 0.0
        %665 = vmatprep.subr.mxu0 0.0
        %666 = vmatpush2.msra.mxu0 0.0
        %667 = vmatprep.subr.mxu0 0.0
        %668 = vmatpush2.msra.mxu0 0.0
        %669 = vmatprep.subr.mxu0 0.0
        %670 = vmatpush2.msra.mxu0 0.0
        %671 = vmatprep.subr.mxu0 0.0
        %672 = vmatpush2.msra.mxu0 0.0
        %673 = vmatprep.mubr.f32.mxu0 0.0
        %674 = vmatmul.mubr.f32.gmra.mxu0 %v607
        %v675 = vpop.f32.mrf.mxu0
        %v676 = vadd.f32 0.0, %v675
        %v677 = vpop.f32.mrf.mxu0
        %678 = vdwg.mxu0
        %v680 = vsel %vm575, %v603, 0
        %682 = vmatprep.subr.mxu0 0.0
        %683 = vmatpush1.msra.mxu0 0.0
        %684 = vmatprep.subr.mxu0 0.0
        %685 = vmatpush1.msra.mxu0 0.0
        %686 = vmatprep.subr.mxu0 0.0
        %687 = vmatpush1.msra.mxu0 0.0
        %688 = vmatprep.subr.mxu0 0.0
        %689 = vmatpush1.msra.mxu0 0.0
        %690 = vmatprep.subr.mxu0 0.0
        %691 = vmatpush1.msra.mxu0 0.0
        %692 = vmatprep.subr.mxu0 0.0
        %693 = vmatpush1.msra.mxu0 0.0
        %694 = vmatprep.subr.mxu0 0.0
        %695 = vmatpush1.msra.mxu0 0.0
        %696 = vmatprep.subr.mxu0 0.0
        %697 = vmatpush1.msra.mxu0 0.0
        %698 = vmatprep.subr.mxu0 0.0
        %699 = vmatpush1.msra.mxu0 0.0
        %700 = vmatprep.subr.mxu0 0.0
        %701 = vmatpush1.msra.mxu0 0.0
        %702 = vmatprep.subr.mxu0 0.0
        %703 = vmatpush1.msra.mxu0 0.0
        %704 = vmatprep.subr.mxu0 0.0
        %705 = vmatpush1.msra.mxu0 0.0
        %706 = vmatprep.subr.mxu0 0.0
        %707 = vmatpush1.msra.mxu0 0.0
        %708 = vmatprep.subr.mxu0 0.0
        %709 = vmatpush1.msra.mxu0 0.0
        %710 = vmatprep.subr.mxu0 0.0
        %711 = vmatpush1.msra.mxu0 0.0
        %712 = vmatprep.subr.mxu0 0.0
        %713 = vmatpush1.msra.mxu0 %v605
        %714 = vmatprep.subr.mxu0 0.0
        %715 = vmatpush2.msra.mxu0 0.0
        %716 = vmatprep.subr.mxu0 0.0
        %717 = vmatpush2.msra.mxu0 0.0
        %718 = vmatprep.subr.mxu0 0.0
        %719 = vmatpush2.msra.mxu0 0.0
        %720 = vmatprep.subr.mxu0 0.0
        %721 = vmatpush2.msra.mxu0 0.0
        %722 = vmatprep.subr.mxu0 0.0
        %723 = vmatpush2.msra.mxu0 0.0
        %724 = vmatprep.subr.mxu0 0.0
        %725 = vmatpush2.msra.mxu0 0.0
        %726 = vmatprep.subr.mxu0 0.0
        %727 = vmatpush2.msra.mxu0 0.0
        %728 = vmatprep.subr.mxu0 0.0
        %729 = vmatpush2.msra.mxu0 0.0
        %730 = vmatprep.subr.mxu0 0.0
        %731 = vmatpush2.msra.mxu0 0.0
        %732 = vmatprep.subr.mxu0 0.0
        %733 = vmatpush2.msra.mxu0 0.0
        %734 = vmatprep.subr.mxu0 0.0
        %735 = vmatpush2.msra.mxu0 0.0
        %736 = vmatprep.subr.mxu0 0.0
        %737 = vmatpush2.msra.mxu0 0.0
        %738 = vmatprep.subr.mxu0 0.0
        %739 = vmatpush2.msra.mxu0 0.0
        %740 = vmatprep.subr.mxu0 0.0
        %741 = vmatpush2.msra.mxu0 0.0
        %742 = vmatprep.subr.mxu0 0.0
        %743 = vmatpush2.msra.mxu0 0.0
        %744 = vmatprep.subr.mxu0 0.0
        %745 = vmatpush2.msra.mxu0 0.0
        %746 = vmatprep.mubr.f32.mxu0 0.0
        %747 = vmatmul.mubr.f32.gmra.mxu0 %v680
        %v748 = vpop.f32.mrf.mxu0
        %v749 = vadd.f32 0.0, %v748
        %v750 = vpop.f32.mrf.mxu0
        %751 = vdwg.mxu0
        %752 = vst.msk [vmem:[%s393] sm:$0xff] %vm575, %v602
        %753 = vst.msk [vmem:[%s393 + $0x8] sm:$0xff] %vm575, %v603
        %754 = vst.msk [vmem:[%s386] sm:$0xff] %vm413, %v676
        %756 = vrot.lane.b32.xlu0 %v749, 16
        %v757 = vpop.permute.xlu0 %756
        %vm759 = vcmask 261248
        %760 = vst.msk [vmem:[%s386] sm:$0xff] %vm759, %v757
        %s761 = sand.u32 %s174, 1
        %s762 = scalar_lea.sflag [#allocation4], %s761
        %s763 = sand.u32 %s174, 1
        %s764 = smul.addr %s763, 8
        %s765 = scalar_lea.vmem [#allocation8], %s764
        %s766 = sand.u32 %s204, 1
        %s767 = scalar_lea.sflag [#allocation10], %s766
        %s768 = sand.u32 %s204, 1
        %s769 = smul.addr %s768, 16
        %s770 = scalar_lea.vmem [#allocation9], %s769
        // Predicated region
        $region49: #{tpu_custom_call.1} parent=35 // pred_check
          %p771 = pneg %p184
        $region50: #{tpu_custom_call.1} parent=35 // pred_check_branch
          %773 = sbr.rel (%p771) target = $region52
        $region51: #{tpu_custom_call.1} parent=35 // pred_region
          %s775 = ssub.s32 128, 128
          %776 = vsyncadd %s762, %s775
          %s777 = sadd.s32 %s35, %s36
          %s778 = sadd.s32 %s777, %s34
          %s779 = smul.addr %s778, 128
          %s780 = scalar_lea.hbm %s4, %s779
          %s782 = sshll.u32 %s765, 4
          %s783 = int_to_ptr.vmem [resolvable:$true] %s782
          %785 = dma.vmem_to_hbm [thread:$0]  %s783, 128, %s780, %s762
        $region52: #{tpu_custom_call.1} parent=35 // pred_fallthru
          _
        // Predicated region
        $region53: #{tpu_custom_call.1} parent=35 // pred_check
          %p786 = pneg %p214
        $region54: #{tpu_custom_call.1} parent=35 // pred_check_branch
          %788 = sbr.rel (%p786) target = $region56
        $region55: #{tpu_custom_call.1} parent=35 // pred_region
          %s789 = smul.u32 2, %s35
          %s791 = ssub.s32 256, 256
          %792 = vsyncadd %s767, %s791
          %s793 = sadd.s32 %s36, %s789
          %s794 = smul.addr %s34, 2
          %s795 = sadd.s32 %s793, %s794
          %s796 = smul.addr %s795, 128
          %s797 = scalar_lea.hbm %s5, %s796
          %s798 = sshll.u32 %s770, 4
          %s799 = int_to_ptr.vmem [resolvable:$true] %s798
          %804 = dma.vmem_to_hbm [thread:$0]  %s799, 256, %s797, %s767, 128, 128, 8
        $region56: #{tpu_custom_call.1} parent=35 // pred_fallthru
          _
      $region36: #{tpu_custom_call.1} parent=5 // pred_fallthru
        _
      %p805 = scmp.le.s32.totalorder 2, %s24
      // Predicated region
      $region57: #{tpu_custom_call.1} parent=5 // pred_check
        %p806 = pneg %p805
      $region58: #{tpu_custom_call.1} parent=5 // pred_check_branch
        %808 = sbr.rel (%p806) target = $region60
      $region59: #{tpu_custom_call.1} parent=5 // pred_region
        %s809 = ssub.s32 %s24, 2
        // Predicated region
        $region61: #{tpu_custom_call.1} parent=59 // pred_check
          %p810 = pneg %p190
        $region62: #{tpu_custom_call.1} parent=59 // pred_check_branch
          %812 = sbr.rel (%p810) target = $region64
        $region63: #{tpu_custom_call.1} parent=59 // pred_region
          %s813 = sand.u32 %s175, 1
          %s814 = scalar_lea.sflag [#allocation4], %s813
          %s815 = sand.u32 %s175, 1
          %s816 = smul.addr %s815, 8
          %s817 = scalar_lea.vmem [#allocation8], %s816
          %818 = dma.done %s814, 128
        $region64: #{tpu_custom_call.1} parent=59 // pred_fallthru
          _
        // Predicated region
        $region65: #{tpu_custom_call.1} parent=59 // pred_check
          %p819 = pneg %p220
        $region66: #{tpu_custom_call.1} parent=59 // pred_check_branch
          %821 = sbr.rel (%p819) target = $region68
        $region67: #{tpu_custom_call.1} parent=59 // pred_region
          %s822 = sand.u32 %s205, 1
          %s823 = scalar_lea.sflag [#allocation10], %s822
          %s824 = sand.u32 %s205, 1
          %s825 = smul.addr %s824, 16
          %s826 = scalar_lea.vmem [#allocation9], %s825
          %827 = dma.done %s823, 256
        $region68: #{tpu_custom_call.1} parent=59 // pred_fallthru
          _
      $region60: #{tpu_custom_call.1} parent=5 // pred_fallthru
        _
    $region6: #{tpu_custom_call.1} parent=1 // loop_footer
      %s28 = sadd.s32 1, %s24
    $region7: #{tpu_custom_call.1} parent=1 // loop_footer_branch
      %23 = sbr.rel target = $region3
    $region8: #{tpu_custom_call.1} parent=1 // loop_exit
      _
    %828 = vsyncpa [#allocation3], 1
    %s829 = scalar_lea.sflag [#allocation3], 1
    %830 = vsyncpa %s829, 1
    %831 = vsyncpa [#allocation6], 1
    %s832 = scalar_lea.sflag [#allocation6], 1
    %833 = vsyncpa %s832, 1
    %834 = vsyncpa [#allocation4], 1
    %s835 = scalar_lea.sflag [#allocation4], 1
    %836 = vsyncpa %s835, 1
    %837 = vsyncpa [#allocation10], 1
    %s838 = scalar_lea.sflag [#allocation10], 1
    %839 = vsyncpa %s838, 1

</llo_original>
